<compile_context>
chip_gen: v7x
topology: tpu7x:2x2x1
jax: 0.10.0
libtpu: 0.0.40
codegen_flags: <defaults>
</compile_context>

<pallas_src>
import math
import functools

import jax
import jax.numpy as jnp
from jax.experimental import pallas as pl
from jax.experimental.pallas import tpu as pltpu


def _round_up(x, m):
    return ((x + m - 1) // m) * m


def _default_min_grid_steps():
    """>=2 grid steps only on v7x (2 TensorCores/chip); 1 on v5e/v6e."""
    try:
        kind = jax.devices()[0].device_kind.lower()
    except Exception:
        return 1
    return 2 if "v7" in kind else 1


def _plan_batch(B, *, max_tile=2048, min_grid_steps=None):
    """Pick (batch_tile, padded_B, grid_steps).

    * One full-batch tile whenever it fits on a single-TC chip: per grid step
      costs ~0.35 us (~600 cycles), a large fraction of this tiny-K problem.
    * On v7x keep >= 2 steps so "parallel" shards across the two TensorCores.
    * Non-divisible batches: cdiv grid + host-side zero-padded rows (sliced
      back off after the call) instead of shrinking the tile to a divisor.
    """
    if min_grid_steps is None:
        min_grid_steps = _default_min_grid_steps()
    steps = max(min_grid_steps, pl.cdiv(B, max_tile))
    if steps <= 1:
        return B, B, 1                       # block dim == full array dim is legal
    tile = _round_up(pl.cdiv(B, steps), 16)  # 16: safe sublane multiple for bf16 blocks
    padded = _round_up(B, tile)
    return tile, padded, padded // tile


def _pad_rows(a, padded_rows):
    if a.shape[0] == padded_rows:
        return a
    return jnp.zeros((padded_rows,) + a.shape[1:], a.dtype).at[: a.shape[0]].set(a)


def _encoder_critic_kernel(is_vae, *refs):
    if is_vae:
        (x_ref, eps_ref,
         w0_ref, b0_ref, w1_ref, b1_ref, w2_ref, b2_ref,
         wmu_ref, bmu_ref, wsg_ref, bsg_ref, out_ref) = refs
    else:
        (x_ref,
         w0_ref, b0_ref, w1_ref, b1_ref, w2_ref, b2_ref,
         out_ref) = refs

    bf16 = jnp.bfloat16

    # MLPNetwork: Linear -> ReLU -> (Dropout) -> Linear -> ReLU -> (Dropout) -> Linear
    # TODO(synk): dropout is treated as identity (inference/eval semantics).
    # bf16 MXU matmuls with f32 accumulation; bias/ReLU/exp/reparam stay f32
    # on the VPU/EUP (safe on v5e which has no bf16 VPU/EUP).
    h = jnp.dot(x_ref[...], w0_ref[...],
                preferred_element_type=jnp.float32) + b0_ref[...]
    h = jnp.maximum(h, 0.0)
    h = jnp.dot(h.astype(bf16), w1_ref[...],
                preferred_element_type=jnp.float32) + b1_ref[...]
    h = jnp.maximum(h, 0.0)
    o = jnp.dot(h.astype(bf16), w2_ref[...],
                preferred_element_type=jnp.float32) + b2_ref[...]

    if is_vae:
        ob = o.astype(bf16)
        mu = jnp.dot(ob, wmu_ref[...],
                     preferred_element_type=jnp.float32) + bmu_ref[...]
        # exp lowers to the EUP slot and overlaps the VPU work on mu.
        sg = jnp.exp(jnp.dot(ob, wsg_ref[...],
                             preferred_element_type=jnp.float32) + bsg_ref[...])
        o = mu + sg * eps_ref[...]
        # TODO(synk): eps could instead be generated on-chip with
        # pltpu.prng_seed + pltpu.stateful_normal (seed as a scalar arg) to
        # remove its DMA stream entirely, at the cost of not being
        # bit-reproducible against an externally supplied eps.

    out_ref[...] = o.astype(out_ref.dtype)


def pack_params(params, *, is_vae=True, weight_dtype=jnp.bfloat16):
    """Kernel layout: weights [in, out] in bf16, biases [1, out] in f32, unpadded."""
    in_size, h0 = params["w0"].shape
    h1 = params["w1"].shape[1]
    out_size = params["w2"].shape[1]
    wd, f32 = weight_dtype, jnp.float32
    packed = {
        "w0": params["w0"].astype(wd), "b0": params["b0"].astype(f32),
        "w1": params["w1"].astype(wd), "b1": params["b1"].astype(f32),
        "w2": params["w2"].astype(wd), "b2": params["b2"].astype(f32),
    }
    if is_vae:
        packed["wmu"] = params["wmu"].astype(wd)
        packed["bmu"] = params["bmu"].astype(f32)
        packed["wsg"] = params["wsg"].astype(wd)
        packed["bsg"] = params["bsg"].astype(f32)
    packed["meta"] = dict(in_size=in_size, h0=h0, h1=h1, out_size=out_size)
    return packed


def encoder_critic_forward(x, eps, packed, *, is_vae=True,
                           batch_tile=None, max_tile=2048, min_grid_steps=None,
                           single_buffer_weights=False, vmem_limit_bytes=None):
    """x: [B, in_size] float (cast to bf16), eps: [B, out_size] f32 (ignored if not is_vae)."""
    meta = packed["meta"]
    B, in_size = x.shape
    assert in_size == meta["in_size"]
    out_size = meta["out_size"]

    if batch_tile is None:
        tile, Bp, n_steps = _plan_batch(B, max_tile=max_tile,
                                        min_grid_steps=min_grid_steps)
    else:
        tile = batch_tile
        Bp = _round_up(B, tile)
        n_steps = Bp // tile
    grid = (n_steps,)

    # bf16 activations on the wire: halves x DMA bytes vs. f32.
    x_k = _pad_rows(x.astype(jnp.bfloat16), Bp)

    in_specs = [pl.BlockSpec((tile, in_size), lambda i: (i, 0))]
    args = [x_k]
    if is_vae:
        # Unpadded eps block: last dim equals the full array dim (legal),
        # 4x fewer bytes than the previous 128-lane-padded stream.
        eps_k = _pad_rows(eps.astype(jnp.float32), Bp)
        in_specs.append(pl.BlockSpec((tile, out_size), lambda i: (i, 0)))
        args.append(eps_k)

    def weight_spec(shape):
        # Full-array block with a constant index_map: fetched once, revisits
        # skipped across grid steps.  single_buffer_weights=True halves the
        # weight-resident VMEM (recommended on v7x's 64 MiB VMEM at production
        # encoder widths, together with an explicit vmem_limit_bytes).
        kwargs = {}
        if single_buffer_weights:
            kwargs["pipeline_mode"] = pl.Buffered(1)
        return pl.BlockSpec(shape, lambda i: tuple(0 for _ in shape), **kwargs)

    weight_keys = ["w0", "b0", "w1", "b1", "w2", "b2"]
    if is_vae:
        weight_keys += ["wmu", "bmu", "wsg", "bsg"]
    for k in weight_keys:
        in_specs.append(weight_spec(packed[k].shape))
        args.append(packed[k])

    kernel = functools.partial(_encoder_critic_kernel, is_vae)

    out = pl.pallas_call(
        kernel,
        out_shape=jax.ShapeDtypeStruct((Bp, out_size), jnp.float32),
        grid_spec=pltpu.PrefetchScalarGridSpec(
            num_scalar_prefetch=0,
            grid=grid,
            in_specs=in_specs,
            # Unpadded output: writes only out_size lanes/row (4x fewer HBM
            # bytes than the previous 128-lane-padded output + slice pass).
            out_specs=pl.BlockSpec((tile, out_size), lambda i: (i, 0)),
        ),
        compiler_params=pltpu.CompilerParams(
            dimension_semantics=("parallel",),
            vmem_limit_bytes=vmem_limit_bytes),
    )(*args)

    return out if Bp == B else out[:B]


# ---------------------------- parameter init (PyTorch-equivalent) ----------

def _xavier_uniform(key, fan_in, fan_out):
    bound = math.sqrt(6.0 / (fan_in + fan_out))
    return jax.random.uniform(key, (fan_in, fan_out), jnp.float32, -bound, bound)


def _kaiming_uniform_linear(key, fan_in, fan_out):
    # PyTorch Linear default weight init (kaiming_uniform with a=sqrt(5))
    bound = 1.0 / math.sqrt(fan_in)
    return jax.random.uniform(key, (fan_in, fan_out), jnp.float32, -bound, bound)


def init_params(key, in_size, hidden_dims, out_size):
    h0, h1 = hidden_dims
    ks = jax.random.split(key, 8)
    return {
        "w0": _kaiming_uniform_linear(ks[0], in_size, h0),
        "b0": jax.random.uniform(ks[1], (1, h0), jnp.float32,
                                 -1.0 / math.sqrt(in_size), 1.0 / math.sqrt(in_size)),
        "w1": _kaiming_uniform_linear(ks[2], h0, h1),
        "b1": jax.random.uniform(ks[3], (1, h1), jnp.float32,
                                 -1.0 / math.sqrt(h0), 1.0 / math.sqrt(h0)),
        "w2": _kaiming_uniform_linear(ks[4], h1, out_size),
        "b2": jax.random.uniform(ks[5], (1, out_size), jnp.float32,
                                 -1.0 / math.sqrt(h1), 1.0 / math.sqrt(h1)),
        # mu_fc / sigma_fc: xavier_uniform weights, zero bias (as in __init__)
        "wmu": _xavier_uniform(ks[6], out_size, out_size),
        "bmu": jnp.zeros((1, out_size), jnp.float32),
        "wsg": _xavier_uniform(ks[7], out_size, out_size),
        "bsg": jnp.zeros((1, out_size), jnp.float32),
    }


if __name__ == "__main__":
    # Small shapes consistent with the module: in_size=32, hidden=[64,64], out_size=32.
    B, IN, HID, OUT = 128, 32, [64, 64], 32

    root = jax.random.PRNGKey(0)
    k_param, k_x, k_eps = jax.random.split(root, 3)

    params = init_params(k_param, IN, HID, OUT)
    x = jax.random.normal(k_x, (B, IN), jnp.float32)
    eps = jax.random.normal(k_eps, (B, OUT), jnp.float32)  # randn_like(out), fixed

    # Reference with the same bf16-matmul / f32-accumulate numerics as the kernel.
    bf = jnp.bfloat16
    w0, w1, w2 = (params[k].astype(bf) for k in ("w0", "w1", "w2"))
    wmu, wsg = params["wmu"].astype(bf), params["wsg"].astype(bf)
    h = jnp.maximum(jnp.dot(x.astype(bf), w0, preferred_element_type=jnp.float32)
                    + params["b0"], 0.0)
    h = jnp.maximum(jnp.dot(h.astype(bf), w1, preferred_element_type=jnp.float32)
                    + params["b1"], 0.0)
    o_ref = jnp.dot(h.astype(bf), w2, preferred_element_type=jnp.float32) + params["b2"]
    mu_ref = jnp.dot(o_ref.astype(bf), wmu, preferred_element_type=jnp.float32) + params["bmu"]
    sg_ref = jnp.exp(jnp.dot(o_ref.astype(bf), wsg, preferred_element_type=jnp.float32)
                     + params["bsg"])
    ref_vae = mu_ref + sg_ref * eps

    # --- VAE path --------------------------------------------------------
    packed_vae = pack_params(params, is_vae=True)
    out = jax.block_until_ready(encoder_critic_forward(x, eps, packed_vae, is_vae=True))
    assert out.shape == (B, OUT)
    assert jnp.allclose(out, ref_vae, atol=2e-3, rtol=2e-3)

    # Loose check against the pure-f32 reference (semantics preserved under bf16 weights).
    hf = jnp.maximum(x @ params["w0"] + params["b0"], 0.0)
    hf = jnp.maximum(hf @ params["w1"] + params["b1"], 0.0)
    of = hf @ params["w2"] + params["b2"]
    ref_f32 = (of @ params["wmu"] + params["bmu"]) \
        + jnp.exp(of @ params["wsg"] + params["bsg"]) * eps
    assert jnp.allclose(out, ref_f32, atol=1e-1, rtol=1e-1)

    # --- non-VAE path (no eps / head tensors DMA'd at all) ----------------
    packed_nv = pack_params(params, is_vae=False)
    out_nv = jax.block_until_ready(encoder_critic_forward(x, None, packed_nv, is_vae=False))
    assert out_nv.shape == (B, OUT)
    assert jnp.allclose(out_nv, o_ref, atol=2e-3, rtol=2e-3)

    # --- odd batch, forced 2 grid steps (exercises cdiv grid + row padding) --
    Bo = 100
    out_o = jax.block_until_ready(
        encoder_critic_forward(x[:Bo], eps[:Bo], packed_vae, is_vae=True,
                               min_grid_steps=2))
    assert out_o.shape == (Bo, OUT)
    assert jnp.allclose(out_o, ref_vae[:Bo], atol=2e-3, rtol=2e-3)

    print("KERNEL_OK")
</pallas_src>

<mosaic_0001>
module attributes {stable_mosaic.version = 11 : i64} {
  func.func @_encoder_critic_kernel(%arg0: i32, %arg1: memref<128x32xbf16, #tpu.memory_space<vmem>>, %arg2: memref<128x32xf32, #tpu.memory_space<vmem>>, %arg3: memref<32x64xbf16, #tpu.memory_space<vmem>>, %arg4: memref<1x64xf32, #tpu.memory_space<vmem>>, %arg5: memref<64x64xbf16, #tpu.memory_space<vmem>>, %arg6: memref<1x64xf32, #tpu.memory_space<vmem>>, %arg7: memref<64x32xbf16, #tpu.memory_space<vmem>>, %arg8: memref<1x32xf32, #tpu.memory_space<vmem>>, %arg9: memref<32x32xbf16, #tpu.memory_space<vmem>>, %arg10: memref<1x32xf32, #tpu.memory_space<vmem>>, %arg11: memref<32x32xbf16, #tpu.memory_space<vmem>>, %arg12: memref<1x32xf32, #tpu.memory_space<vmem>>, %arg13: memref<128x32xf32, #tpu.memory_space<vmem>>) attributes {dimension_semantics = [#tpu.dimension_semantics<parallel>], iteration_bounds = array<i64: 1>, scalar_prefetch = 0 : i64, scratch_operands = 0 : i64, tpu.core_type = #tpu.core_type<tc>, window_params = [{transform_indices = @transform_0, window_bounds = array<i64: 128, 32>}, {transform_indices = @transform_1, window_bounds = array<i64: 128, 32>}, {pipeline_mode = #tpu.pipeline_mode<synchronous>, transform_indices = @transform_2, window_bounds = array<i64: 32, 64>}, {pipeline_mode = #tpu.pipeline_mode<synchronous>, transform_indices = @transform_3, window_bounds = array<i64: 1, 64>}, {pipeline_mode = #tpu.pipeline_mode<synchronous>, transform_indices = @transform_4, window_bounds = array<i64: 64, 64>}, {pipeline_mode = #tpu.pipeline_mode<synchronous>, transform_indices = @transform_5, window_bounds = array<i64: 1, 64>}, {pipeline_mode = #tpu.pipeline_mode<synchronous>, transform_indices = @transform_6, window_bounds = array<i64: 64, 32>}, {pipeline_mode = #tpu.pipeline_mode<synchronous>, transform_indices = @transform_7, window_bounds = array<i64: 1, 32>}, {pipeline_mode = #tpu.pipeline_mode<synchronous>, transform_indices = @transform_8, window_bounds = array<i64: 32, 32>}, {pipeline_mode = #tpu.pipeline_mode<synchronous>, transform_indices = @transform_9, window_bounds = array<i64: 1, 32>}, {pipeline_mode = #tpu.pipeline_mode<synchronous>, transform_indices = @transform_10, window_bounds = array<i64: 32, 32>}, {pipeline_mode = #tpu.pipeline_mode<synchronous>, transform_indices = @transform_11, window_bounds = array<i64: 1, 32>}, {transform_indices = @transform_12, window_bounds = array<i64: 128, 32>}]} {
    %c0 = arith.constant 0 : index
    %c0_0 = arith.constant 0 : index
    %0 = vector.load %arg1[%c0, %c0_0] : memref<128x32xbf16, #tpu.memory_space<vmem>>, vector<128x32xbf16>
    %c0_1 = arith.constant 0 : index
    %c0_2 = arith.constant 0 : index
    %1 = vector.load %arg3[%c0_1, %c0_2] : memref<32x64xbf16, #tpu.memory_space<vmem>>, vector<32x64xbf16>
    %cst = arith.constant dense<0.000000e+00> : vector<128x64xf32>
    %2 = tpu.matmul %0, %1, %cst {dimension_numbers = #tpu.dot_dimension_numbers<[1], [0], [0], [1], [0, 0, 1, 1], [], []>} : vector<128x32xbf16>, vector<32x64xbf16>, vector<128x64xf32> -> vector<128x64xf32>
    %c0_3 = arith.constant 0 : index
    %c0_4 = arith.constant 0 : index
    %3 = vector.load %arg4[%c0_3, %c0_4] : memref<1x64xf32, #tpu.memory_space<vmem>>, vector<1x64xf32>
    %4 = vector.broadcast %3 : vector<1x64xf32> to vector<128x64xf32>
    %5 = arith.addf %2, %4 : vector<128x64xf32>
    %cst_5 = arith.constant 0.000000e+00 : f32
    %6 = vector.broadcast %cst_5 : f32 to vector<128x64xf32>
    %7 = arith.maximumf %5, %6 : vector<128x64xf32>
    %8 = arith.truncf %7 : vector<128x64xf32> to vector<128x64xbf16>
    %c0_6 = arith.constant 0 : index
    %c0_7 = arith.constant 0 : index
    %9 = vector.load %arg5[%c0_6, %c0_7] : memref<64x64xbf16, #tpu.memory_space<vmem>>, vector<64x64xbf16>
    %cst_8 = arith.constant dense<0.000000e+00> : vector<128x64xf32>
    %10 = tpu.matmul %8, %9, %cst_8 {dimension_numbers = #tpu.dot_dimension_numbers<[1], [0], [0], [1], [0, 0, 1, 1], [], []>} : vector<128x64xbf16>, vector<64x64xbf16>, vector<128x64xf32> -> vector<128x64xf32>
    %c0_9 = arith.constant 0 : index
    %c0_10 = arith.constant 0 : index
    %11 = vector.load %arg6[%c0_9, %c0_10] : memref<1x64xf32, #tpu.memory_space<vmem>>, vector<1x64xf32>
    %12 = vector.broadcast %11 : vector<1x64xf32> to vector<128x64xf32>
    %13 = arith.addf %10, %12 : vector<128x64xf32>
    %cst_11 = arith.constant 0.000000e+00 : f32
    %14 = vector.broadcast %cst_11 : f32 to vector<128x64xf32>
    %15 = arith.maximumf %13, %14 : vector<128x64xf32>
    %16 = arith.truncf %15 : vector<128x64xf32> to vector<128x64xbf16>
    %c0_12 = arith.constant 0 : index
    %c0_13 = arith.constant 0 : index
    %17 = vector.load %arg7[%c0_12, %c0_13] : memref<64x32xbf16, #tpu.memory_space<vmem>>, vector<64x32xbf16>
    %cst_14 = arith.constant dense<0.000000e+00> : vector<128x32xf32>
    %18 = tpu.matmul %16, %17, %cst_14 {dimension_numbers = #tpu.dot_dimension_numbers<[1], [0], [0], [1], [0, 0, 1, 1], [], []>} : vector<128x64xbf16>, vector<64x32xbf16>, vector<128x32xf32> -> vector<128x32xf32>
    %c0_15 = arith.constant 0 : index
    %c0_16 = arith.constant 0 : index
    %19 = vector.load %arg8[%c0_15, %c0_16] : memref<1x32xf32, #tpu.memory_space<vmem>>, vector<1x32xf32>
    %20 = vector.broadcast %19 : vector<1x32xf32> to vector<128x32xf32>
    %21 = arith.addf %18, %20 : vector<128x32xf32>
    %22 = arith.truncf %21 : vector<128x32xf32> to vector<128x32xbf16>
    %c0_17 = arith.constant 0 : index
    %c0_18 = arith.constant 0 : index
    %23 = vector.load %arg9[%c0_17, %c0_18] : memref<32x32xbf16, #tpu.memory_space<vmem>>, vector<32x32xbf16>
    %cst_19 = arith.constant dense<0.000000e+00> : vector<128x32xf32>
    %24 = tpu.matmul %22, %23, %cst_19 {dimension_numbers = #tpu.dot_dimension_numbers<[1], [0], [0], [1], [0, 0, 1, 1], [], []>} : vector<128x32xbf16>, vector<32x32xbf16>, vector<128x32xf32> -> vector<128x32xf32>
    %c0_20 = arith.constant 0 : index
    %c0_21 = arith.constant 0 : index
    %25 = vector.load %arg10[%c0_20, %c0_21] : memref<1x32xf32, #tpu.memory_space<vmem>>, vector<1x32xf32>
    %26 = vector.broadcast %25 : vector<1x32xf32> to vector<128x32xf32>
    %27 = arith.addf %24, %26 : vector<128x32xf32>
    %c0_22 = arith.constant 0 : index
    %c0_23 = arith.constant 0 : index
    %28 = vector.load %arg11[%c0_22, %c0_23] : memref<32x32xbf16, #tpu.memory_space<vmem>>, vector<32x32xbf16>
    %cst_24 = arith.constant dense<0.000000e+00> : vector<128x32xf32>
    %29 = tpu.matmul %22, %28, %cst_24 {dimension_numbers = #tpu.dot_dimension_numbers<[1], [0], [0], [1], [0, 0, 1, 1], [], []>} : vector<128x32xbf16>, vector<32x32xbf16>, vector<128x32xf32> -> vector<128x32xf32>
    %c0_25 = arith.constant 0 : index
    %c0_26 = arith.constant 0 : index
    %30 = vector.load %arg12[%c0_25, %c0_26] : memref<1x32xf32, #tpu.memory_space<vmem>>, vector<1x32xf32>
    %31 = vector.broadcast %30 : vector<1x32xf32> to vector<128x32xf32>
    %32 = arith.addf %29, %31 : vector<128x32xf32>
    %33 = math.exp %32 : vector<128x32xf32>
    %c0_27 = arith.constant 0 : index
    %c0_28 = arith.constant 0 : index
    %34 = vector.load %arg2[%c0_27, %c0_28] : memref<128x32xf32, #tpu.memory_space<vmem>>, vector<128x32xf32>
    %35 = arith.mulf %33, %34 : vector<128x32xf32>
    %36 = arith.addf %27, %35 : vector<128x32xf32>
    %c0_29 = arith.constant 0 : index
    %c0_30 = arith.constant 0 : index
    %37 = vector.load %arg13[%c0_29, %c0_30] : memref<128x32xf32, #tpu.memory_space<vmem>>, vector<128x32xf32>
    tpu.vector_store %arg13[%c0_29, %c0_30], %36 {strides = array<i32>} : memref<128x32xf32, #tpu.memory_space<vmem>>, vector<128x32xf32>,
    return
  }
  func.func @transform_0(%arg0: i32) -> (i32, i32) {
    %c0_i32 = arith.constant 0 : i32
    %c0_i32_0 = arith.constant 0 : i32
    return %arg0, %c0_i32 : i32, i32
  }
  func.func @transform_1(%arg0: i32) -> (i32, i32) {
    %c0_i32 = arith.constant 0 : i32
    %c0_i32_0 = arith.constant 0 : i32
    return %arg0, %c0_i32 : i32, i32
  }
  func.func @transform_2(%arg0: i32) -> (i32, i32) {
    %c0_i32 = arith.constant 0 : i32
    %c0_i32_0 = arith.constant 0 : i32
    %c0_i32_1 = arith.constant 0 : i32
    return %c0_i32, %c0_i32_0 : i32, i32
  }
  func.func @transform_3(%arg0: i32) -> (i32, i32) {
    %c0_i32 = arith.constant 0 : i32
    %c0_i32_0 = arith.constant 0 : i32
    %c0_i32_1 = arith.constant 0 : i32
    return %c0_i32, %c0_i32_0 : i32, i32
  }
  func.func @transform_4(%arg0: i32) -> (i32, i32) {
    %c0_i32 = arith.constant 0 : i32
    %c0_i32_0 = arith.constant 0 : i32
    %c0_i32_1 = arith.constant 0 : i32
    return %c0_i32, %c0_i32_0 : i32, i32
  }
  func.func @transform_5(%arg0: i32) -> (i32, i32) {
    %c0_i32 = arith.constant 0 : i32
    %c0_i32_0 = arith.constant 0 : i32
    %c0_i32_1 = arith.constant 0 : i32
    return %c0_i32, %c0_i32_0 : i32, i32
  }
  func.func @transform_6(%arg0: i32) -> (i32, i32) {
    %c0_i32 = arith.constant 0 : i32
    %c0_i32_0 = arith.constant 0 : i32
    %c0_i32_1 = arith.constant 0 : i32
    return %c0_i32, %c0_i32_0 : i32, i32
  }
  func.func @transform_7(%arg0: i32) -> (i32, i32) {
    %c0_i32 = arith.constant 0 : i32
    %c0_i32_0 = arith.constant 0 : i32
    %c0_i32_1 = arith.constant 0 : i32
    return %c0_i32, %c0_i32_0 : i32, i32
  }
  func.func @transform_8(%arg0: i32) -> (i32, i32) {
    %c0_i32 = arith.constant 0 : i32
    %c0_i32_0 = arith.constant 0 : i32
    %c0_i32_1 = arith.constant 0 : i32
    return %c0_i32, %c0_i32_0 : i32, i32
  }
  func.func @transform_9(%arg0: i32) -> (i32, i32) {
    %c0_i32 = arith.constant 0 : i32
    %c0_i32_0 = arith.constant 0 : i32
    %c0_i32_1 = arith.constant 0 : i32
    return %c0_i32, %c0_i32_0 : i32, i32
  }
  func.func @transform_10(%arg0: i32) -> (i32, i32) {
    %c0_i32 = arith.constant 0 : i32
    %c0_i32_0 = arith.constant 0 : i32
    %c0_i32_1 = arith.constant 0 : i32
    return %c0_i32, %c0_i32_0 : i32, i32
  }
  func.func @transform_11(%arg0: i32) -> (i32, i32) {
    %c0_i32 = arith.constant 0 : i32
    %c0_i32_0 = arith.constant 0 : i32
    %c0_i32_1 = arith.constant 0 : i32
    return %c0_i32, %c0_i32_0 : i32, i32
  }
  func.func @transform_12(%arg0: i32) -> (i32, i32) {
    %c0_i32 = arith.constant 0 : i32
    %c0_i32_0 = arith.constant 0 : i32
    return %arg0, %c0_i32 : i32, i32
  }
}

</mosaic_0001>

<llo_original>
// kernel: tpu_custom_call.1
$region0: #{tpu_custom_call.1}
  #allocation0 [shape = 'u32[]', space=smem, size = 0x4, offset = 0x4, fixed_abs, tag = 'smem constant byte address 0x4 - core index']
  #allocation1 [shape = 'u32[144,128]{1,0:T(1,128)}', space=vmem, size = 0x12000, scoped, tag = 'internal scratch']
  %s0 = inlined_call_operand.vmem [shape: bf16[128,32], index: 0, kind: input, shape index: {}]
  %s1 = inlined_call_operand.vmem [shape: f32[128,32], index: 1, kind: input, shape index: {}]
  %s2 = inlined_call_operand.vmem [shape: bf16[32,64], index: 2, kind: input, shape index: {}]
  %s3 = inlined_call_operand.vmem [shape: f32[1,64], index: 3, kind: input, shape index: {}]
  %s4 = inlined_call_operand.vmem [shape: bf16[64,64], index: 4, kind: input, shape index: {}]
  %s5 = inlined_call_operand.vmem [shape: f32[1,64], index: 5, kind: input, shape index: {}]
  %s6 = inlined_call_operand.vmem [shape: bf16[64,32], index: 6, kind: input, shape index: {}]
  %s7 = inlined_call_operand.vmem [shape: f32[1,32], index: 7, kind: input, shape index: {}]
  %s8 = inlined_call_operand.vmem [shape: bf16[32,32], index: 8, kind: input, shape index: {}]
  %s9 = inlined_call_operand.vmem [shape: f32[1,32], index: 9, kind: input, shape index: {}]
  %s10 = inlined_call_operand.vmem [shape: bf16[32,32], index: 10, kind: input, shape index: {}]
  %s11 = inlined_call_operand.vmem [shape: f32[1,32], index: 11, kind: input, shape index: {}]
  %s12 = inlined_call_operand.vmem [shape: f32[128,32], index: 12, kind: output, shape index: {}]
  %s13 = sld [smem:[#allocation0]]
  $region58: #{tpu_custom_call.1} parent=0
    _
  %s15 = ssub.s32 1, %s13
  %s16 = scalar_select 0, %s15, %s13
  // Predicated region
  $region2: #{tpu_custom_call.1} parent=0 // pred_check
    _
  $region3: #{tpu_custom_call.1} parent=0 // pred_check_branch
    %18 = sbr.rel (0) target = $region5
  $region4: #{tpu_custom_call.1} parent=0 // pred_region
    _
  $region5: #{tpu_custom_call.1} parent=0 // pred_fallthru
    _
  // Predicated region
  $region6: #{tpu_custom_call.1} parent=0 // pred_check
    _
  $region7: #{tpu_custom_call.1} parent=0 // pred_check_branch
    %20 = sbr.rel (0) target = $region9
  $region8: #{tpu_custom_call.1} parent=0 // pred_region
    _
  $region9: #{tpu_custom_call.1} parent=0 // pred_fallthru
    _
  // Predicated region
  $region10: #{tpu_custom_call.1} parent=0 // pred_check
    _
  $region11: #{tpu_custom_call.1} parent=0 // pred_check_branch
    %22 = sbr.rel (0) target = $region13
  $region12: #{tpu_custom_call.1} parent=0 // pred_region
    _
  $region13: #{tpu_custom_call.1} parent=0 // pred_fallthru
    _
  // Predicated region
  $region14: #{tpu_custom_call.1} parent=0 // pred_check
    _
  $region15: #{tpu_custom_call.1} parent=0 // pred_check_branch
    %24 = sbr.rel (0) target = $region17
  $region16: #{tpu_custom_call.1} parent=0 // pred_region
    _
  $region17: #{tpu_custom_call.1} parent=0 // pred_fallthru
    _
  // Predicated region
  $region18: #{tpu_custom_call.1} parent=0 // pred_check
    _
  $region19: #{tpu_custom_call.1} parent=0 // pred_check_branch
    %26 = sbr.rel (0) target = $region21
  $region20: #{tpu_custom_call.1} parent=0 // pred_region
    _
  $region21: #{tpu_custom_call.1} parent=0 // pred_fallthru
    _
  // Predicated region
  $region22: #{tpu_custom_call.1} parent=0 // pred_check
    _
  $region23: #{tpu_custom_call.1} parent=0 // pred_check_branch
    %28 = sbr.rel (0) target = $region25
  $region24: #{tpu_custom_call.1} parent=0 // pred_region
    _
  $region25: #{tpu_custom_call.1} parent=0 // pred_fallthru
    _
  // Predicated region
  $region26: #{tpu_custom_call.1} parent=0 // pred_check
    _
  $region27: #{tpu_custom_call.1} parent=0 // pred_check_branch
    %30 = sbr.rel (0) target = $region29
  $region28: #{tpu_custom_call.1} parent=0 // pred_region
    _
  $region29: #{tpu_custom_call.1} parent=0 // pred_fallthru
    _
  // Predicated region
  $region30: #{tpu_custom_call.1} parent=0 // pred_check
    _
  $region31: #{tpu_custom_call.1} parent=0 // pred_check_branch
    %32 = sbr.rel (0) target = $region33
  $region32: #{tpu_custom_call.1} parent=0 // pred_region
    _
  $region33: #{tpu_custom_call.1} parent=0 // pred_fallthru
    _
  // Predicated region
  $region34: #{tpu_custom_call.1} parent=0 // pred_check
    _
  $region35: #{tpu_custom_call.1} parent=0 // pred_check_branch
    %34 = sbr.rel (0) target = $region37
  $region36: #{tpu_custom_call.1} parent=0 // pred_region
    _
  $region37: #{tpu_custom_call.1} parent=0 // pred_fallthru
    _
  // Predicated region
  $region38: #{tpu_custom_call.1} parent=0 // pred_check
    _
  $region39: #{tpu_custom_call.1} parent=0 // pred_check_branch
    %36 = sbr.rel (0) target = $region41
  $region40: #{tpu_custom_call.1} parent=0 // pred_region
    _
  $region41: #{tpu_custom_call.1} parent=0 // pred_fallthru
    _
  // Predicated region
  $region42: #{tpu_custom_call.1} parent=0 // pred_check
    _
  $region43: #{tpu_custom_call.1} parent=0 // pred_check_branch
    %38 = sbr.rel (0) target = $region45
  $region44: #{tpu_custom_call.1} parent=0 // pred_region
    _
  $region45: #{tpu_custom_call.1} parent=0 // pred_fallthru
    _
  // Predicated region
  $region46: #{tpu_custom_call.1} parent=0 // pred_check
    _
  $region47: #{tpu_custom_call.1} parent=0 // pred_check_branch
    %40 = sbr.rel (0) target = $region49
  $region48: #{tpu_custom_call.1} parent=0 // pred_region
    _
  $region49: #{tpu_custom_call.1} parent=0 // pred_fallthru
    _
  %v42 = vld [vmem:[%s0] sm:$0xf]
  %v43 = vld [vmem:[%s0 + $0x4] sm:$0xf]
  %v44 = vld [vmem:[%s0 + $0x8] sm:$0xf]
  %v45 = vld [vmem:[%s0 + $0xc] sm:$0xf]
  %v46 = vld [vmem:[%s0 + $0x10] sm:$0xf]
  %v47 = vld [vmem:[%s0 + $0x14] sm:$0xf]
  %v48 = vld [vmem:[%s0 + $0x18] sm:$0xf]
  %v49 = vld [vmem:[%s0 + $0x1c] sm:$0xf]
  %v50 = vld [vmem:[%s0 + $0x20] sm:$0xf]
  %v51 = vld [vmem:[%s0 + $0x24] sm:$0xf]
  %v52 = vld [vmem:[%s0 + $0x28] sm:$0xf]
  %v53 = vld [vmem:[%s0 + $0x2c] sm:$0xf]
  %v54 = vld [vmem:[%s0 + $0x30] sm:$0xf]
  %v55 = vld [vmem:[%s0 + $0x34] sm:$0xf]
  %v56 = vld [vmem:[%s0 + $0x38] sm:$0xf]
  %v57 = vld [vmem:[%s0 + $0x3c] sm:$0xf]
  %v58 = vld [vmem:[%s2] sm:$0xf]
  %v59 = vld [vmem:[%s2 + $0x4] sm:$0xf]
  %v60 = vld [vmem:[%s2 + $0x8] sm:$0xf]
  %v61 = vld [vmem:[%s2 + $0xc] sm:$0xf]
  %v62 = vld [vmem:[%s3] sm:$0x1]
  %v64 = vlaneseq
  %v65 = vshrl.u32 %v64, 7
  %v66 = vsub.s32 0, %v65
  %v67 = vrot.slane %v62, %v66
  %v85 = vunpack.c.l.b16 %v42
  %v86 = vunpack.c.l.b16 %v43
  %v87 = vunpack.c.l.b16 %v44
  %v88 = vunpack.c.l.b16 %v45
  %v89 = vunpack.c.l.b16 %v46
  %v90 = vunpack.c.l.b16 %v47
  %v91 = vunpack.c.l.b16 %v48
  %v92 = vunpack.c.l.b16 %v49
  %v93 = vunpack.c.l.b16 %v50
  %v94 = vunpack.c.l.b16 %v51
  %v95 = vunpack.c.l.b16 %v52
  %v96 = vunpack.c.l.b16 %v53
  %v97 = vunpack.c.l.b16 %v54
  %v98 = vunpack.c.l.b16 %v55
  %v99 = vunpack.c.l.b16 %v56
  %v100 = vunpack.c.l.b16 %v57
  %v101 = vpack.c.b16 %v86, %v85
  %v102 = vpack.c.b16 %v88, %v87
  %v103 = vpack.c.b16 %v90, %v89
  %v104 = vpack.c.b16 %v92, %v91
  %v105 = vpack.c.b16 %v94, %v93
  %v106 = vpack.c.b16 %v96, %v95
  %v107 = vpack.c.b16 %v98, %v97
  %v108 = vpack.c.b16 %v100, %v99
  %v113 = vunpack.c.l.b16 %v58
  %v114 = vunpack.c.l.b16 %v59
  %v115 = vunpack.c.l.b16 %v60
  %v116 = vunpack.c.l.b16 %v61
  %v117 = vpack.c.b16 %v114, %v113
  %v118 = vpack.c.b16 %v116, %v115
  %vm121 = vcmask 261120
  %v123 = vsel %vm121, %v101, 0
  %v126 = vsel %vm121, %v102, 0
  %v129 = vsel %vm121, %v103, 0
  %v132 = vsel %vm121, %v104, 0
  %v135 = vsel %vm121, %v105, 0
  %v138 = vsel %vm121, %v106, 0
  %v141 = vsel %vm121, %v107, 0
  %v144 = vsel %vm121, %v108, 0
  %146 = vmatprep.subr.bf16.mxu0 0
  %147 = vmatpush1.bf16.msra.mxu0 %v117
  %148 = vmatprep.subr.bf16.mxu0 0
  %149 = vmatpush1.bf16.msra.mxu0 %v118
  %150 = vmatprep.subr.bf16.mxu0 0
  %151 = vmatpush1.bf16.msra.mxu0 0
  %152 = vmatprep.subr.bf16.mxu0 0
  %153 = vmatpush1.bf16.msra.mxu0 0
  %154 = vmatprep.subr.bf16.mxu0 0
  %155 = vmatpush1.bf16.msra.mxu0 0
  %156 = vmatprep.subr.bf16.mxu0 0
  %157 = vmatpush1.bf16.msra.mxu0 0
  %158 = vmatprep.subr.bf16.mxu0 0
  %159 = vmatpush1.bf16.msra.mxu0 0
  %160 = vmatprep.subr.bf16.mxu0 0
  %161 = vmatpush1.bf16.msra.mxu0 0
  %162 = vmatprep.subr.bf16.mxu0 0
  %163 = vmatpush1.bf16.msra.mxu0 0
  %164 = vmatprep.subr.bf16.mxu0 0
  %165 = vmatpush1.bf16.msra.mxu0 0
  %166 = vmatprep.subr.bf16.mxu0 0
  %167 = vmatpush1.bf16.msra.mxu0 0
  %168 = vmatprep.subr.bf16.mxu0 0
  %169 = vmatpush1.bf16.msra.mxu0 0
  %170 = vmatprep.subr.bf16.mxu0 0
  %171 = vmatpush1.bf16.msra.mxu0 0
  %172 = vmatprep.subr.bf16.mxu0 0
  %173 = vmatpush1.bf16.msra.mxu0 0
  %174 = vmatprep.subr.bf16.mxu0 0
  %175 = vmatpush1.bf16.msra.mxu0 0
  %176 = vmatprep.subr.bf16.mxu0 0
  %177 = vmatpush1.bf16.msra.mxu0 0
  %178 = vmatprep.mubr.bf16.mxu0 0
  %179 = vmatmul.mubr.bf16.gmra.mrb[0].mxu0 %v123
  %v180 = vpop.f32.mrb[0].mxu0
  %v181 = vadd.f32 %v67, %v180
  %v182 = vpop.f32.mrb[0].mxu0
  %v183 = vpop.f32.mrb[0].mxu0
  %v184 = vadd.f32 %v67, %v183
  %v185 = vpop.f32.mrb[0].mxu0
  %186 = vmatprep.mubr.bf16.mxu0 0
  %187 = vmatmul.mubr.bf16.gmra.mrb[0].mxu0 %v126
  %v188 = vpop.f32.mrb[0].mxu0
  %v189 = vadd.f32 %v67, %v188
  %v190 = vpop.f32.mrb[0].mxu0
  %v191 = vpop.f32.mrb[0].mxu0
  %v192 = vadd.f32 %v67, %v191
  %v193 = vpop.f32.mrb[0].mxu0
  %194 = vmatprep.mubr.bf16.mxu0 0
  %195 = vmatmul.mubr.bf16.gmra.mrb[0].mxu0 %v129
  %v196 = vpop.f32.mrb[0].mxu0
  %v197 = vadd.f32 %v67, %v196
  %v198 = vpop.f32.mrb[0].mxu0
  %v199 = vpop.f32.mrb[0].mxu0
  %v200 = vadd.f32 %v67, %v199
  %v201 = vpop.f32.mrb[0].mxu0
  %202 = vmatprep.mubr.bf16.mxu0 0
  %203 = vmatmul.mubr.bf16.gmra.mrb[0].mxu0 %v132
  %v204 = vpop.f32.mrb[0].mxu0
  %v205 = vadd.f32 %v67, %v204
  %v206 = vpop.f32.mrb[0].mxu0
  %v207 = vpop.f32.mrb[0].mxu0
  %v208 = vadd.f32 %v67, %v207
  %v209 = vpop.f32.mrb[0].mxu0
  %210 = vmatprep.mubr.bf16.mxu0 0
  %211 = vmatmul.mubr.bf16.gmra.mrb[0].mxu0 %v135
  %v212 = vpop.f32.mrb[0].mxu0
  %v213 = vadd.f32 %v67, %v212
  %v214 = vpop.f32.mrb[0].mxu0
  %v215 = vpop.f32.mrb[0].mxu0
  %v216 = vadd.f32 %v67, %v215
  %v217 = vpop.f32.mrb[0].mxu0
  %218 = vmatprep.mubr.bf16.mxu0 0
  %219 = vmatmul.mubr.bf16.gmra.mrb[0].mxu0 %v138
  %v220 = vpop.f32.mrb[0].mxu0
  %v221 = vadd.f32 %v67, %v220
  %v222 = vpop.f32.mrb[0].mxu0
  %v223 = vpop.f32.mrb[0].mxu0
  %v224 = vadd.f32 %v67, %v223
  %v225 = vpop.f32.mrb[0].mxu0
  %226 = vmatprep.mubr.bf16.mxu0 0
  %227 = vmatmul.mubr.bf16.gmra.mrb[0].mxu0 %v141
  %v228 = vpop.f32.mrb[0].mxu0
  %v229 = vadd.f32 %v67, %v228
  %v230 = vpop.f32.mrb[0].mxu0
  %v231 = vpop.f32.mrb[0].mxu0
  %v232 = vadd.f32 %v67, %v231
  %v233 = vpop.f32.mrb[0].mxu0
  %234 = vmatprep.mubr.bf16.mxu0 0
  %235 = vmatmul.mubr.bf16.gmra.mrb[0].mxu0 %v144
  %v236 = vpop.f32.mrb[0].mxu0
  %v237 = vadd.f32 %v67, %v236
  %v238 = vpop.f32.mrb[0].mxu0
  %v239 = vpop.f32.mrb[0].mxu0
  %v240 = vadd.f32 %v67, %v239
  %v241 = vpop.f32.mrb[0].mxu0
  %242 = vdwg.mxu0
  %v243 = vmax.f32 %v181, 0.0
  %v244 = vmax.f32 %v184, 0.0
  %v245 = vmax.f32 %v189, 0.0
  %v246 = vmax.f32 %v192, 0.0
  %v247 = vmax.f32 %v197, 0.0
  %v248 = vmax.f32 %v200, 0.0
  %v249 = vmax.f32 %v205, 0.0
  %v250 = vmax.f32 %v208, 0.0
  %v251 = vmax.f32 %v213, 0.0
  %v252 = vmax.f32 %v216, 0.0
  %v253 = vmax.f32 %v221, 0.0
  %v254 = vmax.f32 %v224, 0.0
  %v255 = vmax.f32 %v229, 0.0
  %v256 = vmax.f32 %v232, 0.0
  %v257 = vmax.f32 %v237, 0.0
  %v258 = vmax.f32 %v240, 0.0
  %v259 = vpack.c.bf16 %v244, %v243
  %v260 = vpack.c.bf16 %v246, %v245
  %v261 = vpack.c.bf16 %v248, %v247
  %v262 = vpack.c.bf16 %v250, %v249
  %v263 = vpack.c.bf16 %v252, %v251
  %v264 = vpack.c.bf16 %v254, %v253
  %v265 = vpack.c.bf16 %v256, %v255
  %v266 = vpack.c.bf16 %v258, %v257
  %v267 = vld [vmem:[%s4] sm:$0xf]
  %v268 = vld [vmem:[%s4 + $0x4] sm:$0xf]
  %v269 = vld [vmem:[%s4 + $0x8] sm:$0xf]
  %v270 = vld [vmem:[%s4 + $0xc] sm:$0xf]
  %v271 = vld [vmem:[%s4 + $0x10] sm:$0xf]
  %v272 = vld [vmem:[%s4 + $0x14] sm:$0xf]
  %v273 = vld [vmem:[%s4 + $0x18] sm:$0xf]
  %v274 = vld [vmem:[%s4 + $0x1c] sm:$0xf]
  %v275 = vld [vmem:[%s5] sm:$0x1]
  %v277 = vlaneseq
  %v278 = vshrl.u32 %v277, 7
  %v279 = vsub.s32 0, %v278
  %v280 = vrot.slane %v275, %v279
  %v290 = vunpack.c.l.b16 %v267
  %v291 = vunpack.c.l.b16 %v268
  %v292 = vunpack.c.l.b16 %v269
  %v293 = vunpack.c.l.b16 %v270
  %v294 = vunpack.c.l.b16 %v271
  %v295 = vunpack.c.l.b16 %v272
  %v296 = vunpack.c.l.b16 %v273
  %v297 = vunpack.c.l.b16 %v274
  %v298 = vpack.c.b16 %v291, %v290
  %v299 = vpack.c.b16 %v293, %v292
  %v300 = vpack.c.b16 %v295, %v294
  %v301 = vpack.c.b16 %v297, %v296
  %vm306 = vcmask 523264
  %v308 = vsel %vm306, %v259, 0
  %v311 = vsel %vm306, %v260, 0
  %v314 = vsel %vm306, %v261, 0
  %v317 = vsel %vm306, %v262, 0
  %v320 = vsel %vm306, %v263, 0
  %v323 = vsel %vm306, %v264, 0
  %v326 = vsel %vm306, %v265, 0
  %v329 = vsel %vm306, %v266, 0
  %331 = vmatprep.subr.bf16.mxu0 0
  %332 = vmatpush1.bf16.msra.mxu0 %v298
  %333 = vmatprep.subr.bf16.mxu0 0
  %334 = vmatpush1.bf16.msra.mxu0 %v299
  %335 = vmatprep.subr.bf16.mxu0 0
  %336 = vmatpush1.bf16.msra.mxu0 %v300
  %337 = vmatprep.subr.bf16.mxu0 0
  %338 = vmatpush1.bf16.msra.mxu0 %v301
  %339 = vmatprep.subr.bf16.mxu0 0
  %340 = vmatpush1.bf16.msra.mxu0 0
  %341 = vmatprep.subr.bf16.mxu0 0
  %342 = vmatpush1.bf16.msra.mxu0 0
  %343 = vmatprep.subr.bf16.mxu0 0
  %344 = vmatpush1.bf16.msra.mxu0 0
  %345 = vmatprep.subr.bf16.mxu0 0
  %346 = vmatpush1.bf16.msra.mxu0 0
  %347 = vmatprep.subr.bf16.mxu0 0
  %348 = vmatpush1.bf16.msra.mxu0 0
  %349 = vmatprep.subr.bf16.mxu0 0
  %350 = vmatpush1.bf16.msra.mxu0 0
  %351 = vmatprep.subr.bf16.mxu0 0
  %352 = vmatpush1.bf16.msra.mxu0 0
  %353 = vmatprep.subr.bf16.mxu0 0
  %354 = vmatpush1.bf16.msra.mxu0 0
  %355 = vmatprep.subr.bf16.mxu0 0
  %356 = vmatpush1.bf16.msra.mxu0 0
  %357 = vmatprep.subr.bf16.mxu0 0
  %358 = vmatpush1.bf16.msra.mxu0 0
  %359 = vmatprep.subr.bf16.mxu0 0
  %360 = vmatpush1.bf16.msra.mxu0 0
  %361 = vmatprep.subr.bf16.mxu0 0
  %362 = vmatpush1.bf16.msra.mxu0 0
  %363 = vmatprep.mubr.bf16.mxu0 0
  %364 = vmatmul.mubr.bf16.gmra.mrb[0].mxu0 %v308
  %v365 = vpop.f32.mrb[0].mxu0
  %v366 = vadd.f32 %v280, %v365
  %v367 = vpop.f32.mrb[0].mxu0
  %v368 = vpop.f32.mrb[0].mxu0
  %v369 = vadd.f32 %v280, %v368
  %v370 = vpop.f32.mrb[0].mxu0
  %371 = vmatprep.mubr.bf16.mxu0 0
  %372 = vmatmul.mubr.bf16.gmra.mrb[0].mxu0 %v311
  %v373 = vpop.f32.mrb[0].mxu0
  %v374 = vadd.f32 %v280, %v373
  %v375 = vpop.f32.mrb[0].mxu0
  %v376 = vpop.f32.mrb[0].mxu0
  %v377 = vadd.f32 %v280, %v376
  %v378 = vpop.f32.mrb[0].mxu0
  %379 = vmatprep.mubr.bf16.mxu0 0
  %380 = vmatmul.mubr.bf16.gmra.mrb[0].mxu0 %v314
  %v381 = vpop.f32.mrb[0].mxu0
  %v382 = vadd.f32 %v280, %v381
  %v383 = vpop.f32.mrb[0].mxu0
  %v384 = vpop.f32.mrb[0].mxu0
  %v385 = vadd.f32 %v280, %v384
  %v386 = vpop.f32.mrb[0].mxu0
  %387 = vmatprep.mubr.bf16.mxu0 0
  %388 = vmatmul.mubr.bf16.gmra.mrb[0].mxu0 %v317
  %v389 = vpop.f32.mrb[0].mxu0
  %v390 = vadd.f32 %v280, %v389
  %v391 = vpop.f32.mrb[0].mxu0
  %v392 = vpop.f32.mrb[0].mxu0
  %v393 = vadd.f32 %v280, %v392
  %v394 = vpop.f32.mrb[0].mxu0
  %395 = vmatprep.mubr.bf16.mxu0 0
  %396 = vmatmul.mubr.bf16.gmra.mrb[0].mxu0 %v320
  %v397 = vpop.f32.mrb[0].mxu0
  %v398 = vadd.f32 %v280, %v397
  %v399 = vpop.f32.mrb[0].mxu0
  %v400 = vpop.f32.mrb[0].mxu0
  %v401 = vadd.f32 %v280, %v400
  %v402 = vpop.f32.mrb[0].mxu0
  %403 = vmatprep.mubr.bf16.mxu0 0
  %404 = vmatmul.mubr.bf16.gmra.mrb[0].mxu0 %v323
  %v405 = vpop.f32.mrb[0].mxu0
  %v406 = vadd.f32 %v280, %v405
  %v407 = vpop.f32.mrb[0].mxu0
  %v408 = vpop.f32.mrb[0].mxu0
  %v409 = vadd.f32 %v280, %v408
  %v410 = vpop.f32.mrb[0].mxu0
  %411 = vmatprep.mubr.bf16.mxu0 0
  %412 = vmatmul.mubr.bf16.gmra.mrb[0].mxu0 %v326
  %v413 = vpop.f32.mrb[0].mxu0
  %v414 = vadd.f32 %v280, %v413
  %v415 = vpop.f32.mrb[0].mxu0
  %v416 = vpop.f32.mrb[0].mxu0
  %v417 = vadd.f32 %v280, %v416
  %v418 = vpop.f32.mrb[0].mxu0
  %419 = vmatprep.mubr.bf16.mxu0 0
  %420 = vmatmul.mubr.bf16.gmra.mrb[0].mxu0 %v329
  %v421 = vpop.f32.mrb[0].mxu0
  %v422 = vadd.f32 %v280, %v421
  %v423 = vpop.f32.mrb[0].mxu0
  %v424 = vpop.f32.mrb[0].mxu0
  %v425 = vadd.f32 %v280, %v424
  %v426 = vpop.f32.mrb[0].mxu0
  %427 = vdwg.mxu0
  %v428 = vmax.f32 %v366, 0.0
  %v429 = vmax.f32 %v369, 0.0
  %v430 = vmax.f32 %v374, 0.0
  %v431 = vmax.f32 %v377, 0.0
  %v432 = vmax.f32 %v382, 0.0
  %v433 = vmax.f32 %v385, 0.0
  %v434 = vmax.f32 %v390, 0.0
  %v435 = vmax.f32 %v393, 0.0
  %v436 = vmax.f32 %v398, 0.0
  %v437 = vmax.f32 %v401, 0.0
  %v438 = vmax.f32 %v406, 0.0
  %v439 = vmax.f32 %v409, 0.0
  %v440 = vmax.f32 %v414, 0.0
  %v441 = vmax.f32 %v417, 0.0
  %v442 = vmax.f32 %v422, 0.0
  %v443 = vmax.f32 %v425, 0.0
  %v444 = vpack.c.bf16 %v429, %v428
  %v445 = vpack.c.bf16 %v431, %v430
  %v446 = vpack.c.bf16 %v433, %v432
  %v447 = vpack.c.bf16 %v435, %v434
  %v448 = vpack.c.bf16 %v437, %v436
  %v449 = vpack.c.bf16 %v439, %v438
  %v450 = vpack.c.bf16 %v441, %v440
  %v451 = vpack.c.bf16 %v443, %v442
  %v452 = vld [vmem:[%s6] sm:$0xf]
  %v453 = vld [vmem:[%s6 + $0x4] sm:$0xf]
  %v454 = vld [vmem:[%s6 + $0x8] sm:$0xf]
  %v455 = vld [vmem:[%s6 + $0xc] sm:$0xf]
  %v456 = vld [vmem:[%s6 + $0x10] sm:$0xf]
  %v457 = vld [vmem:[%s6 + $0x14] sm:$0xf]
  %v458 = vld [vmem:[%s6 + $0x18] sm:$0xf]
  %v459 = vld [vmem:[%s6 + $0x1c] sm:$0xf]
  %v460 = vld [vmem:[%s7] sm:$0x1]
  %v462 = vlaneseq
  %v463 = vshrl.u32 %v462, 7
  %v464 = vsub.s32 0, %v463
  %v465 = vrot.slane %v460, %v464
  %v475 = vunpack.c.l.b16 %v452
  %v476 = vunpack.c.l.b16 %v453
  %v477 = vunpack.c.l.b16 %v454
  %v478 = vunpack.c.l.b16 %v455
  %v479 = vunpack.c.l.b16 %v456
  %v480 = vunpack.c.l.b16 %v457
  %v481 = vunpack.c.l.b16 %v458
  %v482 = vunpack.c.l.b16 %v459
  %v483 = vpack.c.b16 %v476, %v475
  %v484 = vpack.c.b16 %v478, %v477
  %v485 = vpack.c.b16 %v480, %v479
  %v486 = vpack.c.b16 %v482, %v481
  %v492 = vsel %vm306, %v444, 0
  %v495 = vsel %vm306, %v445, 0
  %v498 = vsel %vm306, %v446, 0
  %v501 = vsel %vm306, %v447, 0
  %v504 = vsel %vm306, %v448, 0
  %v507 = vsel %vm306, %v449, 0
  %v510 = vsel %vm306, %v450, 0
  %v513 = vsel %vm306, %v451, 0
  %515 = vmatprep.subr.bf16.mxu0 0
  %516 = vmatpush1.bf16.msra.mxu0 %v483
  %517 = vmatprep.subr.bf16.mxu0 0
  %518 = vmatpush1.bf16.msra.mxu0 %v484
  %519 = vmatprep.subr.bf16.mxu0 0
  %520 = vmatpush1.bf16.msra.mxu0 %v485
  %521 = vmatprep.subr.bf16.mxu0 0
  %522 = vmatpush1.bf16.msra.mxu0 %v486
  %523 = vmatprep.subr.bf16.mxu0 0
  %524 = vmatpush1.bf16.msra.mxu0 0
  %525 = vmatprep.subr.bf16.mxu0 0
  %526 = vmatpush1.bf16.msra.mxu0 0
  %527 = vmatprep.subr.bf16.mxu0 0
  %528 = vmatpush1.bf16.msra.mxu0 0
  %529 = vmatprep.subr.bf16.mxu0 0
  %530 = vmatpush1.bf16.msra.mxu0 0
  %531 = vmatprep.subr.bf16.mxu0 0
  %532 = vmatpush1.bf16.msra.mxu0 0
  %533 = vmatprep.subr.bf16.mxu0 0
  %534 = vmatpush1.bf16.msra.mxu0 0
  %535 = vmatprep.subr.bf16.mxu0 0
  %536 = vmatpush1.bf16.msra.mxu0 0
  %537 = vmatprep.subr.bf16.mxu0 0
  %538 = vmatpush1.bf16.msra.mxu0 0
  %539 = vmatprep.subr.bf16.mxu0 0
  %540 = vmatpush1.bf16.msra.mxu0 0
  %541 = vmatprep.subr.bf16.mxu0 0
  %542 = vmatpush1.bf16.msra.mxu0 0
  %543 = vmatprep.subr.bf16.mxu0 0
  %544 = vmatpush1.bf16.msra.mxu0 0
  %545 = vmatprep.subr.bf16.mxu0 0
  %546 = vmatpush1.bf16.msra.mxu0 0
  %547 = vmatprep.mubr.bf16.mxu0 0
  %548 = vmatmul.mubr.bf16.gmra.mrb[0].mxu0 %v492
  %v549 = vpop.f32.mrb[0].mxu0
  %v550 = vadd.f32 %v465, %v549
  %v551 = vpop.f32.mrb[0].mxu0
  %v552 = vpop.f32.mrb[0].mxu0
  %v553 = vadd.f32 %v465, %v552
  %v554 = vpop.f32.mrb[0].mxu0
  %555 = vmatprep.mubr.bf16.mxu0 0
  %556 = vmatmul.mubr.bf16.gmra.mrb[0].mxu0 %v495
  %v557 = vpop.f32.mrb[0].mxu0
  %v558 = vadd.f32 %v465, %v557
  %v559 = vpop.f32.mrb[0].mxu0
  %v560 = vpop.f32.mrb[0].mxu0
  %v561 = vadd.f32 %v465, %v560
  %v562 = vpop.f32.mrb[0].mxu0
  %563 = vmatprep.mubr.bf16.mxu0 0
  %564 = vmatmul.mubr.bf16.gmra.mrb[0].mxu0 %v498
  %v565 = vpop.f32.mrb[0].mxu0
  %v566 = vadd.f32 %v465, %v565
  %v567 = vpop.f32.mrb[0].mxu0
  %v568 = vpop.f32.mrb[0].mxu0
  %v569 = vadd.f32 %v465, %v568
  %v570 = vpop.f32.mrb[0].mxu0
  %571 = vmatprep.mubr.bf16.mxu0 0
  %572 = vmatmul.mubr.bf16.gmra.mrb[0].mxu0 %v501
  %v573 = vpop.f32.mrb[0].mxu0
  %v574 = vadd.f32 %v465, %v573
  %v575 = vpop.f32.mrb[0].mxu0
  %v576 = vpop.f32.mrb[0].mxu0
  %v577 = vadd.f32 %v465, %v576
  %v578 = vpop.f32.mrb[0].mxu0
  %579 = vmatprep.mubr.bf16.mxu0 0
  %580 = vmatmul.mubr.bf16.gmra.mrb[0].mxu0 %v504
  %v581 = vpop.f32.mrb[0].mxu0
  %v582 = vadd.f32 %v465, %v581
  %v583 = vpop.f32.mrb[0].mxu0
  %v584 = vpop.f32.mrb[0].mxu0
  %v585 = vadd.f32 %v465, %v584
  %v586 = vpop.f32.mrb[0].mxu0
  %587 = vmatprep.mubr.bf16.mxu0 0
  %588 = vmatmul.mubr.bf16.gmra.mrb[0].mxu0 %v507
  %v589 = vpop.f32.mrb[0].mxu0
  %v590 = vadd.f32 %v465, %v589
  %v591 = vpop.f32.mrb[0].mxu0
  %v592 = vpop.f32.mrb[0].mxu0
  %v593 = vadd.f32 %v465, %v592
  %v594 = vpop.f32.mrb[0].mxu0
  %595 = vmatprep.mubr.bf16.mxu0 0
  %596 = vmatmul.mubr.bf16.gmra.mrb[0].mxu0 %v510
  %v597 = vpop.f32.mrb[0].mxu0
  %v598 = vadd.f32 %v465, %v597
  %v599 = vpop.f32.mrb[0].mxu0
  %v600 = vpop.f32.mrb[0].mxu0
  %v601 = vadd.f32 %v465, %v600
  %v602 = vpop.f32.mrb[0].mxu0
  %603 = vmatprep.mubr.bf16.mxu0 0
  %604 = vmatmul.mubr.bf16.gmra.mrb[0].mxu0 %v513
  %v605 = vpop.f32.mrb[0].mxu0
  %v606 = vadd.f32 %v465, %v605
  %v607 = vpop.f32.mrb[0].mxu0
  %v608 = vpop.f32.mrb[0].mxu0
  %v609 = vadd.f32 %v465, %v608
  %v610 = vpop.f32.mrb[0].mxu0
  %611 = vdwg.mxu0
  %v612 = vpack.c.bf16 %v553, %v550
  %v613 = vpack.c.bf16 %v561, %v558
  %v614 = vpack.c.bf16 %v569, %v566
  %v615 = vpack.c.bf16 %v577, %v574
  %v616 = vpack.c.bf16 %v585, %v582
  %v617 = vpack.c.bf16 %v593, %v590
  %v618 = vpack.c.bf16 %v601, %v598
  %v619 = vpack.c.bf16 %v609, %v606
  %v620 = vld [vmem:[%s8] sm:$0xf]
  %v621 = vld [vmem:[%s8 + $0x4] sm:$0xf]
  %v622 = vld [vmem:[%s8 + $0x8] sm:$0xf]
  %v623 = vld [vmem:[%s8 + $0xc] sm:$0xf]
  %v624 = vld [vmem:[%s9] sm:$0x1]
  %v626 = vlaneseq
  %v627 = vshrl.u32 %v626, 7
  %v628 = vsub.s32 0, %v627
  %v629 = vrot.slane %v624, %v628
  %v635 = vunpack.c.l.b16 %v620
  %v636 = vunpack.c.l.b16 %v621
  %v637 = vunpack.c.l.b16 %v622
  %v638 = vunpack.c.l.b16 %v623
  %v639 = vpack.c.b16 %v636, %v635
  %v640 = vpack.c.b16 %v638, %v637
  %v644 = vsel %vm121, %v612, 0
  %v647 = vsel %vm121, %v613, 0
  %v650 = vsel %vm121, %v614, 0
  %v653 = vsel %vm121, %v615, 0
  %v656 = vsel %vm121, %v616, 0
  %v659 = vsel %vm121, %v617, 0
  %v662 = vsel %vm121, %v618, 0
  %v665 = vsel %vm121, %v619, 0
  %667 = vmatprep.subr.bf16.mxu0 0
  %668 = vmatpush1.bf16.msra.mxu0 %v639
  %669 = vmatprep.subr.bf16.mxu0 0
  %670 = vmatpush1.bf16.msra.mxu0 %v640
  %671 = vmatprep.subr.bf16.mxu0 0
  %672 = vmatpush1.bf16.msra.mxu0 0
  %673 = vmatprep.subr.bf16.mxu0 0
  %674 = vmatpush1.bf16.msra.mxu0 0
  %675 = vmatprep.subr.bf16.mxu0 0
  %676 = vmatpush1.bf16.msra.mxu0 0
  %677 = vmatprep.subr.bf16.mxu0 0
  %678 = vmatpush1.bf16.msra.mxu0 0
  %679 = vmatprep.subr.bf16.mxu0 0
  %680 = vmatpush1.bf16.msra.mxu0 0
  %681 = vmatprep.subr.bf16.mxu0 0
  %682 = vmatpush1.bf16.msra.mxu0 0
  %683 = vmatprep.subr.bf16.mxu0 0
  %684 = vmatpush1.bf16.msra.mxu0 0
  %685 = vmatprep.subr.bf16.mxu0 0
  %686 = vmatpush1.bf16.msra.mxu0 0
  %687 = vmatprep.subr.bf16.mxu0 0
  %688 = vmatpush1.bf16.msra.mxu0 0
  %689 = vmatprep.subr.bf16.mxu0 0
  %690 = vmatpush1.bf16.msra.mxu0 0
  %691 = vmatprep.subr.bf16.mxu0 0
  %692 = vmatpush1.bf16.msra.mxu0 0
  %693 = vmatprep.subr.bf16.mxu0 0
  %694 = vmatpush1.bf16.msra.mxu0 0
  %695 = vmatprep.subr.bf16.mxu0 0
  %696 = vmatpush1.bf16.msra.mxu0 0
  %697 = vmatprep.subr.bf16.mxu0 0
  %698 = vmatpush1.bf16.msra.mxu0 0
  %699 = vmatprep.mubr.bf16.mxu0 0
  %700 = vmatmul.mubr.bf16.gmra.mrb[0].mxu0 %v644
  %v701 = vpop.f32.mrb[0].mxu0
  %v702 = vadd.f32 %v629, %v701
  %v703 = vpop.f32.mrb[0].mxu0
  %v704 = vpop.f32.mrb[0].mxu0
  %v705 = vadd.f32 %v629, %v704
  %v706 = vpop.f32.mrb[0].mxu0
  %707 = vmatprep.mubr.bf16.mxu0 0
  %708 = vmatmul.mubr.bf16.gmra.mrb[0].mxu0 %v647
  %v709 = vpop.f32.mrb[0].mxu0
  %v710 = vadd.f32 %v629, %v709
  %v711 = vpop.f32.mrb[0].mxu0
  %v712 = vpop.f32.mrb[0].mxu0
  %v713 = vadd.f32 %v629, %v712
  %v714 = vpop.f32.mrb[0].mxu0
  %715 = vmatprep.mubr.bf16.mxu0 0
  %716 = vmatmul.mubr.bf16.gmra.mrb[0].mxu0 %v650
  %v717 = vpop.f32.mrb[0].mxu0
  %v718 = vadd.f32 %v629, %v717
  %v719 = vpop.f32.mrb[0].mxu0
  %v720 = vpop.f32.mrb[0].mxu0
  %v721 = vadd.f32 %v629, %v720
  %v722 = vpop.f32.mrb[0].mxu0
  %723 = vmatprep.mubr.bf16.mxu0 0
  %724 = vmatmul.mubr.bf16.gmra.mrb[0].mxu0 %v653
  %v725 = vpop.f32.mrb[0].mxu0
  %v726 = vadd.f32 %v629, %v725
  %v727 = vpop.f32.mrb[0].mxu0
  %v728 = vpop.f32.mrb[0].mxu0
  %v729 = vadd.f32 %v629, %v728
  %v730 = vpop.f32.mrb[0].mxu0
  %731 = vmatprep.mubr.bf16.mxu0 0
  %732 = vmatmul.mubr.bf16.gmra.mrb[0].mxu0 %v656
  %v733 = vpop.f32.mrb[0].mxu0
  %v734 = vadd.f32 %v629, %v733
  %v735 = vpop.f32.mrb[0].mxu0
  %v736 = vpop.f32.mrb[0].mxu0
  %v737 = vadd.f32 %v629, %v736
  %v738 = vpop.f32.mrb[0].mxu0
  %739 = vmatprep.mubr.bf16.mxu0 0
  %740 = vmatmul.mubr.bf16.gmra.mrb[0].mxu0 %v659
  %v741 = vpop.f32.mrb[0].mxu0
  %v742 = vadd.f32 %v629, %v741
  %v743 = vpop.f32.mrb[0].mxu0
  %v744 = vpop.f32.mrb[0].mxu0
  %v745 = vadd.f32 %v629, %v744
  %v746 = vpop.f32.mrb[0].mxu0
  %747 = vmatprep.mubr.bf16.mxu0 0
  %748 = vmatmul.mubr.bf16.gmra.mrb[0].mxu0 %v662
  %v749 = vpop.f32.mrb[0].mxu0
  %v750 = vadd.f32 %v629, %v749
  %v751 = vpop.f32.mrb[0].mxu0
  %v752 = vpop.f32.mrb[0].mxu0
  %v753 = vadd.f32 %v629, %v752
  %v754 = vpop.f32.mrb[0].mxu0
  %755 = vmatprep.mubr.bf16.mxu0 0
  %756 = vmatmul.mubr.bf16.gmra.mrb[0].mxu0 %v665
  %v757 = vpop.f32.mrb[0].mxu0
  %v758 = vadd.f32 %v629, %v757
  %v759 = vpop.f32.mrb[0].mxu0
  %v760 = vpop.f32.mrb[0].mxu0
  %v761 = vadd.f32 %v629, %v760
  %v762 = vpop.f32.mrb[0].mxu0
  %763 = vdwg.mxu0
  %v764 = vld [vmem:[%s10] sm:$0xf]
  %v765 = vld [vmem:[%s10 + $0x4] sm:$0xf]
  %v766 = vld [vmem:[%s10 + $0x8] sm:$0xf]
  %v767 = vld [vmem:[%s10 + $0xc] sm:$0xf]
  %v768 = vld [vmem:[%s11] sm:$0x1]
  %v770 = vlaneseq
  %v771 = vshrl.u32 %v770, 7
  %v772 = vsub.s32 0, %v771
  %v773 = vrot.slane %v768, %v772
  %v779 = vunpack.c.l.b16 %v764
  %v780 = vunpack.c.l.b16 %v765
  %v781 = vunpack.c.l.b16 %v766
  %v782 = vunpack.c.l.b16 %v767
  %v783 = vpack.c.b16 %v780, %v779
  %v784 = vpack.c.b16 %v782, %v781
  %787 = vmatprep.subr.bf16.mxu0 0
  %788 = vmatpush1.bf16.msra.mxu0 %v783
  %789 = vmatprep.subr.bf16.mxu0 0
  %790 = vmatpush1.bf16.msra.mxu0 %v784
  %791 = vmatprep.subr.bf16.mxu0 0
  %792 = vmatpush1.bf16.msra.mxu0 0
  %793 = vmatprep.subr.bf16.mxu0 0
  %794 = vmatpush1.bf16.msra.mxu0 0
  %795 = vmatprep.subr.bf16.mxu0 0
  %796 = vmatpush1.bf16.msra.mxu0 0
  %797 = vmatprep.subr.bf16.mxu0 0
  %798 = vmatpush1.bf16.msra.mxu0 0
  %799 = vmatprep.subr.bf16.mxu0 0
  %800 = vmatpush1.bf16.msra.mxu0 0
  %801 = vmatprep.subr.bf16.mxu0 0
  %802 = vmatpush1.bf16.msra.mxu0 0
  %803 = vmatprep.subr.bf16.mxu0 0
  %804 = vmatpush1.bf16.msra.mxu0 0
  %805 = vmatprep.subr.bf16.mxu0 0
  %806 = vmatpush1.bf16.msra.mxu0 0
  %807 = vmatprep.subr.bf16.mxu0 0
  %808 = vmatpush1.bf16.msra.mxu0 0
  %809 = vmatprep.subr.bf16.mxu0 0
  %810 = vmatpush1.bf16.msra.mxu0 0
  %811 = vmatprep.subr.bf16.mxu0 0
  %812 = vmatpush1.bf16.msra.mxu0 0
  %813 = vmatprep.subr.bf16.mxu0 0
  %814 = vmatpush1.bf16.msra.mxu0 0
  %815 = vmatprep.subr.bf16.mxu0 0
  %816 = vmatpush1.bf16.msra.mxu0 0
  %817 = vmatprep.subr.bf16.mxu0 0
  %818 = vmatpush1.bf16.msra.mxu0 0
  %819 = vmatprep.mubr.bf16.mxu0 0
  %820 = vmatmul.mubr.bf16.gmra.mrb[0].mxu0 %v644
  %v821 = vpop.f32.mrb[0].mxu0
  %v822 = vadd.f32 %v773, %v821
  %v823 = vpop.f32.mrb[0].mxu0
  %v824 = vpop.f32.mrb[0].mxu0
  %v825 = vadd.f32 %v773, %v824
  %v826 = vpop.f32.mrb[0].mxu0
  %827 = vmatprep.mubr.bf16.mxu0 0
  %828 = vmatmul.mubr.bf16.gmra.mrb[0].mxu0 %v647
  %v829 = vpop.f32.mrb[0].mxu0
  %v830 = vadd.f32 %v773, %v829
  %v831 = vpop.f32.mrb[0].mxu0
  %v832 = vpop.f32.mrb[0].mxu0
  %v833 = vadd.f32 %v773, %v832
  %v834 = vpop.f32.mrb[0].mxu0
  %835 = vmatprep.mubr.bf16.mxu0 0
  %836 = vmatmul.mubr.bf16.gmra.mrb[0].mxu0 %v650
  %v837 = vpop.f32.mrb[0].mxu0
  %v838 = vadd.f32 %v773, %v837
  %v839 = vpop.f32.mrb[0].mxu0
  %v840 = vpop.f32.mrb[0].mxu0
  %v841 = vadd.f32 %v773, %v840
  %v842 = vpop.f32.mrb[0].mxu0
  %843 = vmatprep.mubr.bf16.mxu0 0
  %844 = vmatmul.mubr.bf16.gmra.mrb[0].mxu0 %v653
  %v845 = vpop.f32.mrb[0].mxu0
  %v846 = vadd.f32 %v773, %v845
  %v847 = vpop.f32.mrb[0].mxu0
  %v848 = vpop.f32.mrb[0].mxu0
  %v849 = vadd.f32 %v773, %v848
  %v850 = vpop.f32.mrb[0].mxu0
  %851 = vmatprep.mubr.bf16.mxu0 0
  %852 = vmatmul.mubr.bf16.gmra.mrb[0].mxu0 %v656
  %v853 = vpop.f32.mrb[0].mxu0
  %v854 = vadd.f32 %v773, %v853
  %v855 = vpop.f32.mrb[0].mxu0
  %v856 = vpop.f32.mrb[0].mxu0
  %v857 = vadd.f32 %v773, %v856
  %v858 = vpop.f32.mrb[0].mxu0
  %859 = vmatprep.mubr.bf16.mxu0 0
  %860 = vmatmul.mubr.bf16.gmra.mrb[0].mxu0 %v659
  %v861 = vpop.f32.mrb[0].mxu0
  %v862 = vadd.f32 %v773, %v861
  %v863 = vpop.f32.mrb[0].mxu0
  %v864 = vpop.f32.mrb[0].mxu0
  %v865 = vadd.f32 %v773, %v864
  %v866 = vpop.f32.mrb[0].mxu0
  %867 = vmatprep.mubr.bf16.mxu0 0
  %868 = vmatmul.mubr.bf16.gmra.mrb[0].mxu0 %v662
  %v869 = vpop.f32.mrb[0].mxu0
  %v870 = vadd.f32 %v773, %v869
  %v871 = vpop.f32.mrb[0].mxu0
  %v872 = vpop.f32.mrb[0].mxu0
  %v873 = vadd.f32 %v773, %v872
  %v874 = vpop.f32.mrb[0].mxu0
  %875 = vmatprep.mubr.bf16.mxu0 0
  %876 = vmatmul.mubr.bf16.gmra.mrb[0].mxu0 %v665
  %v877 = vpop.f32.mrb[0].mxu0
  %v878 = vadd.f32 %v773, %v877
  %v879 = vpop.f32.mrb[0].mxu0
  %v880 = vpop.f32.mrb[0].mxu0
  %v881 = vadd.f32 %v773, %v880
  %v882 = vpop.f32.mrb[0].mxu0
  %883 = vdwg.mxu0
  %v884 = vmul.f32 %v822, 1.442695
  %v885 = vpow.pop %v884
  %v886 = vmul.f32 %v825, 1.442695
  %v887 = vpow.pop %v886
  %v888 = vmul.f32 %v830, 1.442695
  %v889 = vpow.pop %v888
  %v890 = vmul.f32 %v833, 1.442695
  %v891 = vpow.pop %v890
  %v892 = vmul.f32 %v838, 1.442695
  %v893 = vpow.pop %v892
  %v894 = vmul.f32 %v841, 1.442695
  %v895 = vpow.pop %v894
  %v896 = vmul.f32 %v846, 1.442695
  %v897 = vpow.pop %v896
  %v898 = vmul.f32 %v849, 1.442695
  %v899 = vpow.pop %v898
  %v900 = vmul.f32 %v854, 1.442695
  %v901 = vpow.pop %v900
  %v902 = vmul.f32 %v857, 1.442695
  %v903 = vpow.pop %v902
  %v904 = vmul.f32 %v862, 1.442695
  %v905 = vpow.pop %v904
  %v906 = vmul.f32 %v865, 1.442695
  %v907 = vpow.pop %v906
  %v908 = vmul.f32 %v870, 1.442695
  %v909 = vpow.pop %v908
  %v910 = vmul.f32 %v873, 1.442695
  %v911 = vpow.pop %v910
  %v912 = vmul.f32 %v878, 1.442695
  %v913 = vpow.pop %v912
  %v914 = vmul.f32 %v881, 1.442695
  %v915 = vpow.pop %v914
  %v916 = vld [vmem:[%s1] sm:$0xff]
  %v917 = vld [vmem:[%s1 + $0x8] sm:$0xff]
  %v918 = vld [vmem:[%s1 + $0x10] sm:$0xff]
  %v919 = vld [vmem:[%s1 + $0x18] sm:$0xff]
  %v920 = vld [vmem:[%s1 + $0x20] sm:$0xff]
  %v921 = vld [vmem:[%s1 + $0x28] sm:$0xff]
  %v922 = vld [vmem:[%s1 + $0x30] sm:$0xff]
  %v923 = vld [vmem:[%s1 + $0x38] sm:$0xff]
  %v924 = vld [vmem:[%s1 + $0x40] sm:$0xff]
  %v925 = vld [vmem:[%s1 + $0x48] sm:$0xff]
  %v926 = vld [vmem:[%s1 + $0x50] sm:$0xff]
  %v927 = vld [vmem:[%s1 + $0x58] sm:$0xff]
  %v928 = vld [vmem:[%s1 + $0x60] sm:$0xff]
  %v929 = vld [vmem:[%s1 + $0x68] sm:$0xff]
  %v930 = vld [vmem:[%s1 + $0x70] sm:$0xff]
  %v931 = vld [vmem:[%s1 + $0x78] sm:$0xff]
  %v932 = vmul.f32 %v885, %v916
  %v933 = vmul.f32 %v887, %v917
  %v934 = vmul.f32 %v889, %v918
  %v935 = vmul.f32 %v891, %v919
  %v936 = vmul.f32 %v893, %v920
  %v937 = vmul.f32 %v895, %v921
  %v938 = vmul.f32 %v897, %v922
  %v939 = vmul.f32 %v899, %v923
  %v940 = vmul.f32 %v901, %v924
  %v941 = vmul.f32 %v903, %v925
  %v942 = vmul.f32 %v905, %v926
  %v943 = vmul.f32 %v907, %v927
  %v944 = vmul.f32 %v909, %v928
  %v945 = vmul.f32 %v911, %v929
  %v946 = vmul.f32 %v913, %v930
  %v947 = vmul.f32 %v915, %v931
  %v948 = vadd.f32 %v702, %v932
  %v949 = vadd.f32 %v705, %v933
  %v950 = vadd.f32 %v710, %v934
  %v951 = vadd.f32 %v713, %v935
  %v952 = vadd.f32 %v718, %v936
  %v953 = vadd.f32 %v721, %v937
  %v954 = vadd.f32 %v726, %v938
  %v955 = vadd.f32 %v729, %v939
  %v956 = vadd.f32 %v734, %v940
  %v957 = vadd.f32 %v737, %v941
  %v958 = vadd.f32 %v742, %v942
  %v959 = vadd.f32 %v745, %v943
  %v960 = vadd.f32 %v750, %v944
  %v961 = vadd.f32 %v753, %v945
  %v962 = vadd.f32 %v758, %v946
  %v963 = vadd.f32 %v761, %v947
  %964 = vst.msk [vmem:[%s12] sm:$0xff] %vm121, %v948
  %965 = vst.msk [vmem:[%s12 + $0x8] sm:$0xff] %vm121, %v949
  %966 = vst.msk [vmem:[%s12 + $0x10] sm:$0xff] %vm121, %v950
  %967 = vst.msk [vmem:[%s12 + $0x18] sm:$0xff] %vm121, %v951
  %968 = vst.msk [vmem:[%s12 + $0x20] sm:$0xff] %vm121, %v952
  %969 = vst.msk [vmem:[%s12 + $0x28] sm:$0xff] %vm121, %v953
  %970 = vst.msk [vmem:[%s12 + $0x30] sm:$0xff] %vm121, %v954
  %971 = vst.msk [vmem:[%s12 + $0x38] sm:$0xff] %vm121, %v955
  %972 = vst.msk [vmem:[%s12 + $0x40] sm:$0xff] %vm121, %v956
  %973 = vst.msk [vmem:[%s12 + $0x48] sm:$0xff] %vm121, %v957
  %974 = vst.msk [vmem:[%s12 + $0x50] sm:$0xff] %vm121, %v958
  %975 = vst.msk [vmem:[%s12 + $0x58] sm:$0xff] %vm121, %v959
  %976 = vst.msk [vmem:[%s12 + $0x60] sm:$0xff] %vm121, %v960
  %977 = vst.msk [vmem:[%s12 + $0x68] sm:$0xff] %vm121, %v961
  %978 = vst.msk [vmem:[%s12 + $0x70] sm:$0xff] %vm121, %v962
  %979 = vst.msk [vmem:[%s12 + $0x78] sm:$0xff] %vm121, %v963
  // Predicated region
  $region50: #{tpu_custom_call.1} parent=0 // pred_check
    _
  $region51: #{tpu_custom_call.1} parent=0 // pred_check_branch
    %981 = sbr.rel (0) target = $region53
  $region52: #{tpu_custom_call.1} parent=0 // pred_region
    _
  $region53: #{tpu_custom_call.1} parent=0 // pred_fallthru
    _
  // Predicated region
  $region54: #{tpu_custom_call.1} parent=0 // pred_check
    _
  $region55: #{tpu_custom_call.1} parent=0 // pred_check_branch
    %983 = sbr.rel (0) target = $region57
  $region56: #{tpu_custom_call.1} parent=0 // pred_region
    _
  $region57: #{tpu_custom_call.1} parent=0 // pred_fallthru
    _

</llo_original>
